<compile_context>
chip_gen: v5e
topology: v5e:2x2
jax: 0.10.0
libtpu: 0.0.40
codegen_flags: <defaults>
</compile_context>

<pallas_src>
import functools

import jax
import jax.numpy as jnp
from jax.experimental import pallas as pl
from jax.experimental.pallas import tpu as pltpu


# -----------------------------------------------------------------------------
# Tiling helpers
# -----------------------------------------------------------------------------

def _round_up(x, m):
    return ((x + m - 1) // m) * m


def _pick_oc_tile(oc):
    """Output-channel tile: lane-dense multiple of 128 when the layer allows,
    preferring >=2 tiles so both v7x TensorCores get work."""
    if oc % 256 == 0 and oc >= 512:
        return 256
    if oc % 128 == 0 and oc >= 256:
        return 128
    return oc                       # full dim (legal even when not a 128-multiple)


def _pick_m_tile(m):
    for t in (512, 256, 128):
        if m % t == 0 and m >= 2 * t:
            return t
    if m >= 16:                     # two blocks so both TCs get work on v7x
        return _round_up((m + 1) // 2, 8)
    return _round_up(m, 8)


def _vmem_limit(block_bytes):
    # Block-size-derived scoped-VMEM limit: stay at the 32 MiB default when the
    # blocks are small, never exceed 48 MiB (headroom under v7x's 64 MiB/TC).
    return int(min(48 * 1024 * 1024, max(32 * 1024 * 1024, 4 * block_bytes)))


# -----------------------------------------------------------------------------
# Pallas kernel 1: direct stride-1 convolution with fused epilogue
#   grid = (batch, oc_tiles); x block = full padded image; reduction over the
#   KHxKW taps happens inside the kernel (no HBM im2col).  Epilogue is either
#   bias(+ReLU) or InstanceNorm+affine(+ReLU), written once as bf16.
# -----------------------------------------------------------------------------

def _direct_conv_kernel(x_ref, w_ref, b_ref, g_ref, bt_ref, o_ref, *,
                        kh, kw, dilation, oh, ow, cin, relu, fuse_in, eps,
                        flat_x):
    if flat_x:                                   # 1x1 conv: x block is (1, H*W, Cin)
        acc = jnp.dot(x_ref[0], w_ref[...], preferred_element_type=jnp.float32)
    else:                                        # KxK conv: x block is (1, Hp, Wp, Cin)
        acc = None
        for i in range(kh):
            for j in range(kw):
                h0 = i * dilation
                w0 = j * dilation
                win = x_ref[0, h0:h0 + oh, w0:w0 + ow, :]          # (oh, ow, cin)
                a = win.reshape(oh * ow, cin)
                t = i * kw + j
                p = jnp.dot(a, w_ref[t * cin:(t + 1) * cin, :],
                            preferred_element_type=jnp.float32)
                acc = p if acc is None else acc + p

    if fuse_in:
        # InstanceNorm2d(affine=True, eps=1e-5): per-channel stats over the full
        # per-image spatial extent (exactly the rows of this block).
        mean = jnp.mean(acc, axis=0, keepdims=True)
        var = jnp.mean(jnp.square(acc - mean), axis=0, keepdims=True)
        r = (acc - mean) * jax.lax.rsqrt(var + eps)
        r = r * g_ref[...] + bt_ref[...]
    else:
        r = acc + b_ref[...]
    if relu:
        r = jnp.maximum(r, 0.0)
    o_ref[0] = r.astype(o_ref.dtype)


@functools.partial(jax.jit, static_argnames=("kh", "kw", "padding", "dilation",
                                             "relu", "fuse_in"))
def _direct_conv(x, wmat, bias, gamma, beta, *, kh, kw, padding, dilation,
                 relu, fuse_in):
    n, h, w, cin = x.shape
    _, oc = wmat.shape
    oh = h + 2 * padding - dilation * (kh - 1)
    ow = w + 2 * padding - dilation * (kw - 1)
    toc = _pick_oc_tile(oc)

    flat_x = (kh == 1 and kw == 1 and padding == 0)
    if flat_x:
        xk = x.reshape(n, h * w, cin)
        x_spec = pl.BlockSpec((1, h * w, cin), lambda b, c: (b, 0, 0))
        xb = h * w * cin * 2
    else:
        if padding:
            x = jnp.pad(x, ((0, 0), (padding, padding), (padding, padding), (0, 0)))
        hp, wp = h + 2 * padding, w + 2 * padding
        xk = x
        x_spec = pl.BlockSpec((1, hp, wp, cin), lambda b, c: (b, 0, 0, 0))
        xb = hp * wp * cin * 2

    wb = kh * kw * cin * toc * 2
    ob = oh * ow * toc * 2
    accb = oh * ow * max(toc, cin) * 4

    out = pl.pallas_call(
        functools.partial(_direct_conv_kernel, kh=kh, kw=kw, dilation=dilation,
                          oh=oh, ow=ow, cin=cin, relu=relu, fuse_in=fuse_in,
                          eps=1e-5, flat_x=flat_x),
        out_shape=jax.ShapeDtypeStruct((n, oh * ow, oc), jnp.bfloat16),
        grid_spec=pltpu.PrefetchScalarGridSpec(
            num_scalar_prefetch=0,
            grid=(n, oc // toc),
            in_specs=[
                x_spec,
                pl.BlockSpec((kh * kw * cin, toc), lambda b, c: (0, c)),
                pl.BlockSpec((1, toc), lambda b, c: (0, c)),
                pl.BlockSpec((1, toc), lambda b, c: (0, c)),
                pl.BlockSpec((1, toc), lambda b, c: (0, c)),
            ],
            out_specs=pl.BlockSpec((1, oh * ow, toc), lambda b, c: (b, 0, c)),
        ),
        compiler_params=pltpu.CompilerParams(
            dimension_semantics=("parallel", "parallel"),
            vmem_limit_bytes=_vmem_limit(xb + wb + ob + accb),
        ),
    )(xk, wmat, bias, gamma, beta)
    return out.reshape(n, oh, ow, oc)


# -----------------------------------------------------------------------------
# Pallas kernel 2: tiled matmul + bias(+ReLU), bf16 out, store-once epilogue
#   (only used for the stride-2 7x7 stem conv via a tiny XLA im2col; 3 input
#    channels -> the 49x patch replication is negligible).
# -----------------------------------------------------------------------------

def _mm_bias_kernel(a_ref, b_ref, bias_ref, o_ref, *, relu):
    r = jnp.dot(a_ref[...], b_ref[...], preferred_element_type=jnp.float32)
    r = r + bias_ref[...]
    if relu:
        r = jnp.maximum(r, 0.0)
    o_ref[...] = r.astype(o_ref.dtype)


def _im2col_nhwc(x, kh, kw, stride, padding, dilation):
    n, h, w, c = x.shape
    xp = jnp.pad(x, ((0, 0), (padding, padding), (padding, padding), (0, 0)))
    hp, wp = h + 2 * padding, w + 2 * padding
    oh = (hp - dilation * (kh - 1) - 1) // stride + 1
    ow = (wp - dilation * (kw - 1) - 1) // stride + 1
    cols = []
    for i in range(kh):
        for j in range(kw):
            h0, w0 = i * dilation, j * dilation
            cols.append(xp[:, h0:h0 + stride * (oh - 1) + 1:stride,
                           w0:w0 + stride * (ow - 1) + 1:stride, :])
    patches = jnp.concatenate(cols, axis=-1)                 # (N, OH, OW, KH*KW*C)
    return patches.reshape(n * oh * ow, kh * kw * c), oh, ow


@functools.partial(jax.jit, static_argnames=("kh", "kw", "stride", "padding",
                                             "dilation", "relu"))
def _strided_conv(x, wmat, bias, *, kh, kw, stride, padding, dilation, relu):
    n = x.shape[0]
    k, oc = wmat.shape
    patches, oh, ow = _im2col_nhwc(x, kh, kw, stride, padding, dilation)
    m = patches.shape[0]
    tm = _pick_m_tile(m)
    mp = _round_up(m, tm)
    if mp != m:
        patches = jnp.pad(patches, ((0, mp - m), (0, 0)))
    tn = _pick_oc_tile(oc)
    out = pl.pallas_call(
        functools.partial(_mm_bias_kernel, relu=relu),
        out_shape=jax.ShapeDtypeStruct((mp, oc), jnp.bfloat16),
        grid_spec=pltpu.PrefetchScalarGridSpec(
            num_scalar_prefetch=0,
            grid=(mp // tm, oc // tn),
            in_specs=[
                pl.BlockSpec((tm, k), lambda i, j: (i, 0)),
                pl.BlockSpec((k, tn), lambda i, j: (0, j)),
                pl.BlockSpec((1, tn), lambda i, j: (0, j)),
            ],
            out_specs=pl.BlockSpec((tm, tn), lambda i, j: (i, j)),
        ),
        compiler_params=pltpu.CompilerParams(
            dimension_semantics=("parallel", "parallel"),
            vmem_limit_bytes=_vmem_limit((tm * k + k * tn + tm * tn) * 2
                                         + tm * tn * 4),
        ),
    )(patches, wmat, bias)
    out = out[:m] if mp != m else out
    return out.reshape(n, oh, ow, oc)


def conv2d(x, wmat, kh, kw, *, stride=1, padding=0, dilation=1,
           bias=None, gamma=None, beta=None, relu=False):
    """PyTorch-semantics Conv2d, NHWC bf16 in/out. wmat: (KH*KW*IC, OC) bf16.
    If gamma/beta are given, InstanceNorm2d(affine)+epilogue is fused."""
    _, oc = wmat.shape
    if bias is None:
        bias = jnp.zeros((1, oc), jnp.float32)
    fuse_in = gamma is not None
    if not fuse_in:
        gamma = jnp.zeros((1, oc), jnp.float32)
        beta = jnp.zeros((1, oc), jnp.float32)
    if stride == 1:
        return _direct_conv(x, wmat, bias, gamma, beta, kh=kh, kw=kw,
                            padding=padding, dilation=dilation, relu=relu,
                            fuse_in=fuse_in)
    assert not fuse_in  # only the stem 7x7/s2 conv is strided; it has no norm
    return _strided_conv(x, wmat, bias, kh=kh, kw=kw, stride=stride,
                         padding=padding, dilation=dilation, relu=relu)


# -----------------------------------------------------------------------------
# Pallas kernel 3: batch norm (train-mode batch statistics) + affine + ReLU
#   x: (1, L, C) bf16, L = N*H*W; stats over L per channel; bf16 out.
# -----------------------------------------------------------------------------

def _chan_norm_relu_kernel(x_ref, g_ref, b_ref, o_ref, *, eps):
    x = x_ref[...].astype(jnp.float32)
    mean = jnp.mean(x, axis=1, keepdims=True)
    var = jnp.mean(jnp.square(x - mean), axis=1, keepdims=True)   # biased var
    y = (x - mean) * jax.lax.rsqrt(var + eps)
    y = y * g_ref[...] + b_ref[...]
    o_ref[...] = jnp.maximum(y, 0.0).astype(o_ref.dtype)


@jax.jit
def _batch_norm_relu_impl(x2, gamma, beta):
    _, L, C = x2.shape
    tc = _pick_oc_tile(C)
    return pl.pallas_call(
        functools.partial(_chan_norm_relu_kernel, eps=1e-5),
        out_shape=jax.ShapeDtypeStruct((1, L, C), jnp.bfloat16),
        grid_spec=pltpu.PrefetchScalarGridSpec(
            num_scalar_prefetch=0,
            grid=(C // tc,),
            in_specs=[
                pl.BlockSpec((1, L, tc), lambda c: (0, 0, c)),
                pl.BlockSpec((1, 1, tc), lambda c: (0, 0, c)),
                pl.BlockSpec((1, 1, tc), lambda c: (0, 0, c)),
            ],
            out_specs=pl.BlockSpec((1, L, tc), lambda c: (0, 0, c)),
        ),
        compiler_params=pltpu.CompilerParams(
            dimension_semantics=("parallel",),
            vmem_limit_bytes=_vmem_limit(L * tc * (2 + 2 + 4)),
        ),
    )(x2, gamma, beta)


def batch_norm_relu(x, gamma, beta):
    """BatchNorm2d (train-mode batch statistics, eps=1e-5) + ReLU. x: NHWC bf16."""
    # TODO(synk): pretrained DenseNet eval-mode running stats are unavailable;
    # batch statistics are used instead.
    # TODO(synk): at very large N*H*W the single (1, L, TC) block should be
    # L-tiled with a two-pass stats scheme (v7x 64 MiB VMEM budget).
    n, h, w, c = x.shape
    y = _batch_norm_relu_impl(x.reshape(1, n * h * w, c), gamma, beta)
    return y.reshape(n, h, w, c)


# -----------------------------------------------------------------------------
# Small data-movement ops left in plain JAX (negligible compute), NHWC bf16
# -----------------------------------------------------------------------------

def max_pool2x2(x):
    n, h, w, c = x.shape
    return x.reshape(n, h // 2, 2, w // 2, 2, c).max(axis=(2, 4))


def avg_pool2x2(x):
    n, h, w, c = x.shape
    return x.reshape(n, h // 2, 2, w // 2, 2, c).mean(axis=(2, 4)).astype(x.dtype)


def upsample_nearest2x(x):
    return jnp.repeat(jnp.repeat(x, 2, axis=1), 2, axis=2)


def _flatten_conv_weight(w):
    """OIHW (PyTorch) -> matmul-ready (KH*KW*IC, OC) bf16, done once at init."""
    oc, ic, kh, kw = w.shape
    return jnp.transpose(w, (2, 3, 1, 0)).reshape(kh * kw * ic, oc).astype(
        jnp.bfloat16)


# -----------------------------------------------------------------------------
# Deterministic parameter generation
# -----------------------------------------------------------------------------

class ParamGen:
    def __init__(self, seed=0):
        self._key = jax.random.PRNGKey(seed)

    def _next(self):
        self._key, sub = jax.random.split(self._key)
        return sub

    def conv_weight(self, oc, ic, kh, kw):
        scale = float(ic * kh * kw) ** -0.5
        return scale * jax.random.normal(self._next(), (oc, ic, kh, kw), jnp.float32)

    def bias(self, n):
        return 0.01 * jax.random.normal(self._next(), (n,), jnp.float32)

    def norm_affine(self, n):
        g = 1.0 + 0.1 * jax.random.normal(self._next(), (n,), jnp.float32)
        b = 0.1 * jax.random.normal(self._next(), (n,), jnp.float32)
        return g, b


# -----------------------------------------------------------------------------
# Model modules (functional mirrors of the PyTorch modules, NHWC bf16 internally)
# -----------------------------------------------------------------------------

class BasicConv:
    def __init__(self, pg, in_c, out_c, use_bn=False, kernel_size=1,
                 stride=1, padding=0, dilation=1):
        self.use_bn = use_bn
        self.k = kernel_size
        self.stride, self.padding, self.dilation = stride, padding, dilation
        self.wmat = _flatten_conv_weight(
            pg.conv_weight(out_c, in_c, kernel_size, kernel_size))
        if use_bn:
            g, b = pg.norm_affine(out_c)
            self.gamma = g.reshape(1, out_c)
            self.beta = b.reshape(1, out_c)
            self.bias = None
        else:
            self.bias = pg.bias(out_c).reshape(1, out_c)
            self.gamma = self.beta = None

    def __call__(self, x):
        return conv2d(x, self.wmat, self.k, self.k, stride=self.stride,
                      padding=self.padding, dilation=self.dilation,
                      bias=self.bias, gamma=self.gamma, beta=self.beta,
                      relu=True)


class UpsampleBlock:
    def __init__(self, pg, in_c, out_c):
        self.conv = BasicConv(pg, in_c, out_c, kernel_size=3, stride=1, padding=1)

    def __call__(self, x):
        return self.conv(upsample_nearest2x(x))


class DecodingBlock:
    def __init__(self, pg, low, high, out):
        self.F1 = BasicConv(pg, low, high, use_bn=True, kernel_size=1)
        # F2 (ConvTranspose2d) exists in the PyTorch module but is never used in forward.
        self.F3 = BasicConv(pg, 2 * high, out, use_bn=True, kernel_size=1)
        self.upsample = UpsampleBlock(pg, high, high)

    def __call__(self, low_feature, high_feature):
        f1 = self.F1(low_feature)
        up = self.upsample(high_feature)
        return self.F3(jnp.concatenate([f1, up], axis=-1))


class MSABlock:
    """The four parallel 1x1 projections (branch3x3[0], branch5x5[0],
    branch7x7[0], branch1x1) share the same input, so they are batched into one
    fused conv+InstanceNorm+ReLU kernel over concatenated output channels."""

    def __init__(self, pg, in_c, out_c, use_bn=True):
        br = in_c // 2
        self.br = br
        self.use_bn = use_bn
        b1 = BasicConv(pg, in_c, out_c, use_bn=use_bn, kernel_size=1)
        b3a = BasicConv(pg, in_c, br, use_bn=use_bn, kernel_size=1)
        b5a = BasicConv(pg, in_c, br, use_bn=use_bn, kernel_size=1)
        b7a = BasicConv(pg, in_c, br, use_bn=use_bn, kernel_size=1)
        parts = [b3a, b5a, b7a, b1]
        self.wmat = jnp.concatenate([p.wmat for p in parts], axis=1)
        if use_bn:
            self.gamma = jnp.concatenate([p.gamma for p in parts], axis=-1)
            self.beta = jnp.concatenate([p.beta for p in parts], axis=-1)
            self.bias = None
        else:
            self.bias = jnp.concatenate([p.bias for p in parts], axis=-1)
            self.gamma = self.beta = None
        self.b3b = BasicConv(pg, br, out_c, use_bn=use_bn, kernel_size=3,
                             padding=1, dilation=1)
        self.b5b = BasicConv(pg, br, out_c, use_bn=use_bn, kernel_size=5,
                             padding=4, dilation=2)
        self.b7b = BasicConv(pg, br, out_c, use_bn=use_bn, kernel_size=7,
                             padding=9, dilation=3)

    def __call__(self, x):
        y = conv2d(x, self.wmat, 1, 1, bias=self.bias, gamma=self.gamma,
                   beta=self.beta, relu=True)
        br = self.br
        x3, x5, x7 = y[..., :br], y[..., br:2 * br], y[..., 2 * br:3 * br]
        b1 = y[..., 3 * br:]
        # TODO(synk): the b3+b5+b7 elementwise add stays in XLA (fusing it into
        # the last branch conv epilogue would need cross-branch inputs).
        out = self.b3b(x3) + self.b5b(x5) + self.b7b(x7)
        return jnp.concatenate([out, b1], axis=-1)


# --- densenet121 pieces used by the backbones (synthetic weights) ---

class DenseLayer:
    def __init__(self, pg, in_c, growth=32, bn_size=4):
        g1, b1 = pg.norm_affine(in_c)
        self.g1, self.b1 = g1.reshape(1, 1, in_c), b1.reshape(1, 1, in_c)
        self.w1 = _flatten_conv_weight(pg.conv_weight(bn_size * growth, in_c, 1, 1))
        g2, b2 = pg.norm_affine(bn_size * growth)
        self.g2 = g2.reshape(1, 1, bn_size * growth)
        self.b2 = b2.reshape(1, 1, bn_size * growth)
        self.w2 = _flatten_conv_weight(pg.conv_weight(growth, bn_size * growth, 3, 3))

    def __call__(self, x):
        y = batch_norm_relu(x, self.g1, self.b1)
        y = conv2d(y, self.w1, 1, 1)
        y = batch_norm_relu(y, self.g2, self.b2)
        return conv2d(y, self.w2, 3, 3, padding=1)


class DenseBlock:
    def __init__(self, pg, in_c, num_layers=6, growth=32):
        self.layers = [DenseLayer(pg, in_c + i * growth, growth)
                       for i in range(num_layers)]

    def __call__(self, x):
        for layer in self.layers:
            x = jnp.concatenate([x, layer(x)], axis=-1)
        return x


class Transition:
    def __init__(self, pg, in_c, out_c):
        g, b = pg.norm_affine(in_c)
        self.g, self.b = g.reshape(1, 1, in_c), b.reshape(1, 1, in_c)
        self.w = _flatten_conv_weight(pg.conv_weight(out_c, in_c, 1, 1))

    def __call__(self, x):
        x = batch_norm_relu(x, self.g, self.b)
        x = conv2d(x, self.w, 1, 1)
        return avg_pool2x2(x)


class FLF:
    def __init__(self, pg, gray=False):
        in_channels = 1 if gray else 3
        # Backbone1 = densenet.features[0:3]: conv0 (7x7 s2 p3, no bias) + norm0 + relu0
        self.conv0_w = _flatten_conv_weight(pg.conv_weight(64, in_channels, 7, 7))
        g, b = pg.norm_affine(64)
        self.norm0_g, self.norm0_b = g.reshape(1, 1, 64), b.reshape(1, 1, 64)
        # Backbone2 = densenet.features[4:6]: denseblock1 + transition1
        self.block1 = DenseBlock(pg, 64, num_layers=6, growth=32)   # 64 -> 256
        self.trans1 = Transition(pg, 256, 128)                      # 256 -> 128, /2
        # TODO(synk): densenet121 pretrained weights replaced by deterministic synthetic init.

        self.MSA1 = MSABlock(pg, 128, 128)
        self.MSA2 = MSABlock(pg, 256, 256)

        self.Decoding1_1 = DecodingBlock(pg, 256, 512, 256)
        self.Decoding1_2 = DecodingBlock(pg, 128, 256, 128)
        self.Decoding1_3 = DecodingBlock(pg, 64, 128, 64)
        self.Decoding2_1 = DecodingBlock(pg, 128, 256, 64)
        self.Decoding2_2 = DecodingBlock(pg, 64, 128, 32)
        self.Decoding3 = DecodingBlock(pg, 32, 64, 8)

        self.upsample1_1 = UpsampleBlock(pg, 512, 256)
        self.upsample1_2 = UpsampleBlock(pg, 256, 128)
        self.upsample2_1 = UpsampleBlock(pg, 256, 128)
        self.upsample3 = UpsampleBlock(pg, 8, 8)

        self.FinalConv1 = BasicConv(pg, 8, 4, use_bn=True, kernel_size=3,
                                    stride=1, padding=1)
        self.FinalConv2 = BasicConv(pg, 4, 3, use_bn=True, kernel_size=1, stride=1)

    def __call__(self, x, gt_map):
        # gt_map is accepted (as in the PyTorch signature) but unused in forward.
        x = jnp.transpose(x, (0, 2, 3, 1)).astype(jnp.bfloat16)       # NCHW -> NHWC bf16
        x1 = conv2d(x, self.conv0_w, 7, 7, stride=2, padding=3)
        x1 = batch_norm_relu(x1, self.norm0_g, self.norm0_b)          # 64  @ H/2
        x2 = self.trans1(self.block1(x1))                             # 128 @ H/4
        x3 = max_pool2x2(self.MSA1(x2))                               # 256 @ H/8
        x4 = max_pool2x2(self.MSA2(x3))                               # 512 @ H/16

        up1_1 = self.upsample1_1(x4)                                  # 256 @ H/8
        up1_2 = self.upsample1_2(up1_1)                               # 128 @ H/4
        decode1_1 = self.Decoding1_1(x3, x4)                          # 256 @ H/8
        decode1_2 = self.Decoding1_2(x2, up1_1)                       # 128 @ H/4
        decode1_3 = self.Decoding1_3(x1, up1_2)                       # 64  @ H/2
        up2_1 = self.upsample2_1(decode1_1)                           # 128 @ H/4
        decode2_1 = self.Decoding2_1(decode1_2, decode1_1)            # 64  @ H/4
        decode2_2 = self.Decoding2_2(decode1_3, up2_1)                # 32  @ H/2
        decode3 = self.Decoding3(decode2_2, decode2_1)                # 8   @ H/2
        up3 = self.upsample3(decode3)                                 # 8   @ H
        final1 = self.FinalConv1(up3)                                 # 4   @ H
        es_map = self.FinalConv2(final1)                              # 3   @ H
        return jnp.transpose(es_map, (0, 3, 1, 2)).astype(jnp.float32)  # -> NCHW f32


# -----------------------------------------------------------------------------
# main
# -----------------------------------------------------------------------------

if __name__ == "__main__":
    pg = ParamGen(seed=0)
    model = FLF(pg, gray=False)

    key = jax.random.PRNGKey(0)
    kx, kg = jax.random.split(key)
    x = jax.random.normal(kx, (2, 3, 32, 32), jnp.float32)       # NCHW input
    gt_map = jax.random.normal(kg, (2, 1, 32, 32), jnp.float32)  # unused by forward

    fwd = jax.jit(model.__call__)
    es_map = jax.block_until_ready(fwd(x, gt_map))
    assert es_map.shape == (2, 3, 32, 32), es_map.shape
    assert bool(jnp.all(jnp.isfinite(es_map)))
    print("KERNEL_OK")
</pallas_src>

<mosaic_0001>
module attributes {stable_mosaic.version = 11 : i64} {
  func.func @_mm_bias_kernel(%arg0: i32, %arg1: i32, %arg2: memref<256x147xbf16, #tpu.memory_space<vmem>>, %arg3: memref<147x64xbf16, #tpu.memory_space<vmem>>, %arg4: memref<1x64xf32, #tpu.memory_space<vmem>>, %arg5: memref<256x64xbf16, #tpu.memory_space<vmem>>) attributes {dimension_semantics = [#tpu.dimension_semantics<parallel>, #tpu.dimension_semantics<parallel>], iteration_bounds = array<i64: 2, 1>, scalar_prefetch = 0 : i64, scratch_operands = 0 : i64, tpu.core_type = #tpu.core_type<tc>, window_params = [{transform_indices = @transform_0, window_bounds = array<i64: 256, 147>}, {transform_indices = @transform_1, window_bounds = array<i64: 147, 64>}, {transform_indices = @transform_2, window_bounds = array<i64: 1, 64>}, {transform_indices = @transform_3, window_bounds = array<i64: 256, 64>}]} {
    %c0 = arith.constant 0 : index
    %c0_0 = arith.constant 0 : index
    %0 = vector.load %arg2[%c0, %c0_0] : memref<256x147xbf16, #tpu.memory_space<vmem>>, vector<256x147xbf16>
    %c0_1 = arith.constant 0 : index
    %c0_2 = arith.constant 0 : index
    %1 = vector.load %arg3[%c0_1, %c0_2] : memref<147x64xbf16, #tpu.memory_space<vmem>>, vector<147x64xbf16>
    %cst = arith.constant dense<0.000000e+00> : vector<256x64xf32>
    %2 = tpu.matmul %0, %1, %cst {dimension_numbers = #tpu.dot_dimension_numbers<[1], [0], [0], [1], [0, 0, 1, 1], [], []>} : vector<256x147xbf16>, vector<147x64xbf16>, vector<256x64xf32> -> vector<256x64xf32>
    %c0_3 = arith.constant 0 : index
    %c0_4 = arith.constant 0 : index
    %3 = vector.load %arg4[%c0_3, %c0_4] : memref<1x64xf32, #tpu.memory_space<vmem>>, vector<1x64xf32>
    %4 = vector.broadcast %3 : vector<1x64xf32> to vector<256x64xf32>
    %5 = arith.addf %2, %4 : vector<256x64xf32>
    %6 = arith.truncf %5 : vector<256x64xf32> to vector<256x64xbf16>
    %c0_5 = arith.constant 0 : index
    %c0_6 = arith.constant 0 : index
    %7 = vector.load %arg5[%c0_5, %c0_6] : memref<256x64xbf16, #tpu.memory_space<vmem>>, vector<256x64xbf16>
    tpu.vector_store %arg5[%c0_5, %c0_6], %6 {strides = array<i32>} : memref<256x64xbf16, #tpu.memory_space<vmem>>, vector<256x64xbf16>,
    return
  }
  func.func @transform_0(%arg0: i32, %arg1: i32) -> (i32, i32) {
    %c0_i32 = arith.constant 0 : i32
    %c0_i32_0 = arith.constant 0 : i32
    return %arg0, %c0_i32 : i32, i32
  }
  func.func @transform_1(%arg0: i32, %arg1: i32) -> (i32, i32) {
    %c0_i32 = arith.constant 0 : i32
    %c0_i32_0 = arith.constant 0 : i32
    return %c0_i32, %arg1 : i32, i32
  }
  func.func @transform_2(%arg0: i32, %arg1: i32) -> (i32, i32) {
    %c0_i32 = arith.constant 0 : i32
    %c0_i32_0 = arith.constant 0 : i32
    return %c0_i32, %arg1 : i32, i32
  }
  func.func @transform_3(%arg0: i32, %arg1: i32) -> (i32, i32) {
    %c0_i32 = arith.constant 0 : i32
    return %arg0, %arg1 : i32, i32
  }
}

</mosaic_0001>

<llo_original>
// kernel: _strided_conv.1
$region0: #{_strided_conv.1}
  #allocation0 [shape = 'u32[]', space=smem, size = 0x4, offset = 0x4, fixed_abs, tag = 'smem constant byte address 0x4 - core index']
  #allocation1 [shape = 'u32[72,128]{1,0:T(1,128)}', space=vmem, size = 0x9000, scoped, tag = 'internal scratch']
  %s0 = inlined_call_operand.vmem [shape: bf16[512,147], index: 0, kind: input, shape index: {}]
  %s1 = inlined_call_operand.vmem [shape: bf16[147,64], index: 1, kind: input, shape index: {}]
  %s2 = inlined_call_operand.vmem [shape: f32[1,64], index: 2, kind: input, shape index: {}]
  %s3 = inlined_call_operand.hbm [shape: bf16[512,64], index: 3, kind: output, shape index: {}]
  %s4 = sld [smem:[#allocation0]]
  $region45: #{_strided_conv.1} parent=0
    _
  %s6 = ssub.s32 1, %s4
  %s7 = scalar_select 0, %s6, %s4
  $region1: #{_strided_conv.1} parent=0
    #allocation2 [shape = 'u8[131072]{0}', space=vmem, size = 0x20000, scoped, tag = 'output window, operand 0']
    #allocation3 [shape = 's32[2]{0}', space=sflag, size = 0x8, scoped, tag = 'scoped memory for _strided_conv.1']
    %8 = vsyncpa [#allocation3], 0
    %s9 = scalar_lea.sflag [#allocation3], 1
    %10 = vsyncpa %s9, 0
    loop: start=0, step=1, limit=4
    $region2: #{_strided_conv.1} parent=1 // loop_pre_header
      _
    $region3: #{_strided_conv.1} parent=1 // loop_header
      %s12 = sphi 0, %s16
      %p13 = scmp.ge.s32.totalorder %s12, 4
      %s19 = sphi 0, %s31
      %s20 = sphi 0, %s27
      %s21 = sphi 0, %s19
      %s22 = sphi 0, %s20
      %s23 = sphi 0, %s21
      %s24 = sphi 0, %s22
      %s34 = sphi 0, %s36
      %s37 = sphi 0, %s34
      %s38 = sphi 0, %s37
      %s54 = sphi 0, %s38
      %s60 = sphi 0, %s62
      %s63 = sphi 0, %s60
      %s64 = sphi 0, %s63
      %s80 = sphi 0, %s64
      %s86 = sphi 0, %s88
      %s89 = sphi 0, %s86
      %s90 = sphi 0, %s89
      %s106 = sphi 0, %s90
      %s114 = sphi 0, %s116
      %s117 = sphi 0, %s114
      %s118 = sphi 0, %s117
      %s134 = sphi 0, %s118
    $region4: #{_strided_conv.1} parent=1 // loop_header_branch
      %15 = sbr.rel (%p13) target = $region8
    $region5: #{_strided_conv.1} parent=1 // loop_body
      %s17 = ssub.s32 %s12, 1
      %s18 = ssub.s32 %s12, 2
      %s25 = sadd.s32 1, %s20
      %p26 = scmp.ge.s32.totalorder %s25, 1
      %s27 = scalar_select %p26, 0, %s25
      %s28 = sadd.s32 1, %s19
      %s29 = scalar_select %p26, %s28, %s19
      %p30 = scmp.ge.s32.totalorder %s29, 2
      %s31 = scalar_select %p30, 0, %s29
      %s32 = ssub.s32 %s19, %s31
      %p33 = scmp.eq.s32.totalorder %s32, 0
      %s35 = sadd.s32 %s34, 1
      %s36 = scalar_select %p33, %s34, %s35
      %p39 = pneg %p33
      %p40 = scmp.eq.s32.totalorder %s12, 1
      %p41 = por %p39, %p40
      %p42 = scmp.ne.s32.totalorder %s34, %s37
      %p43 = scmp.eq.s32.totalorder %s12, 0
      %p44 = por %p42, %p43
      %p45 = scmp.ne.s32.totalorder %s34, %s37
      %p46 = scmp.eq.s32.totalorder %s17, 1
      %p47 = por %p45, %p46
      %p48 = scmp.ne.s32.totalorder %s37, %s38
      %p49 = scmp.eq.s32.totalorder %s17, 0
      %p50 = por %p48, %p49
      %p51 = scmp.ne.s32.totalorder %s37, %s38
      %p52 = scmp.eq.s32.totalorder %s18, 1
      %p53 = por %p51, %p52
      %p55 = scmp.ne.s32.totalorder %s38, %s54
      %p56 = scmp.eq.s32.totalorder %s18, 0
      %p57 = por %p55, %p56
      %s58 = ssub.s32 %s20, %s27
      %p59 = scmp.eq.s32.totalorder %s58, 0
      %s61 = sadd.s32 %s60, 1
      %s62 = scalar_select %p59, %s60, %s61
      %p65 = pneg %p59
      %p66 = scmp.eq.s32.totalorder %s12, 1
      %p67 = por %p65, %p66
      %p68 = scmp.ne.s32.totalorder %s60, %s63
      %p69 = scmp.eq.s32.totalorder %s12, 0
      %p70 = por %p68, %p69
      %p71 = scmp.ne.s32.totalorder %s60, %s63
      %p72 = scmp.eq.s32.totalorder %s17, 1
      %p73 = por %p71, %p72
      %p74 = scmp.ne.s32.totalorder %s63, %s64
      %p75 = scmp.eq.s32.totalorder %s17, 0
      %p76 = por %p74, %p75
      %p77 = scmp.ne.s32.totalorder %s63, %s64
      %p78 = scmp.eq.s32.totalorder %s18, 1
      %p79 = por %p77, %p78
      %p81 = scmp.ne.s32.totalorder %s64, %s80
      %p82 = scmp.eq.s32.totalorder %s18, 0
      %p83 = por %p81, %p82
      %s84 = ssub.s32 %s20, %s27
      %p85 = scmp.eq.s32.totalorder %s84, 0
      %s87 = sadd.s32 %s86, 1
      %s88 = scalar_select %p85, %s86, %s87
      %p91 = pneg %p85
      %p92 = scmp.eq.s32.totalorder %s12, 1
      %p93 = por %p91, %p92
      %p94 = scmp.ne.s32.totalorder %s86, %s89
      %p95 = scmp.eq.s32.totalorder %s12, 0
      %p96 = por %p94, %p95
      %p97 = scmp.ne.s32.totalorder %s86, %s89
      %p98 = scmp.eq.s32.totalorder %s17, 1
      %p99 = por %p97, %p98
      %p100 = scmp.ne.s32.totalorder %s89, %s90
      %p101 = scmp.eq.s32.totalorder %s17, 0
      %p102 = por %p100, %p101
      %p103 = scmp.ne.s32.totalorder %s89, %s90
      %p104 = scmp.eq.s32.totalorder %s18, 1
      %p105 = por %p103, %p104
      %p107 = scmp.ne.s32.totalorder %s90, %s106
      %p108 = scmp.eq.s32.totalorder %s18, 0
      %p109 = por %p107, %p108
      %s110 = ssub.s32 %s19, %s31
      %s111 = ssub.s32 %s20, %s27
      %s112 = sor.u32 %s110, %s111
      %p113 = scmp.eq.s32.totalorder %s112, 0
      %s115 = sadd.s32 %s114, 1
      %s116 = scalar_select %p113, %s114, %s115
      %p119 = pneg %p113
      %p120 = scmp.eq.s32.totalorder %s12, 1
      %p121 = por %p119, %p120
      %p122 = scmp.ne.s32.totalorder %s114, %s117
      %p123 = scmp.eq.s32.totalorder %s12, 0
      %p124 = por %p122, %p123
      %p125 = scmp.ne.s32.totalorder %s114, %s117
      %p126 = scmp.eq.s32.totalorder %s17, 1
      %p127 = por %p125, %p126
      %p128 = scmp.ne.s32.totalorder %s117, %s118
      %p129 = scmp.eq.s32.totalorder %s17, 0
      %p130 = por %p128, %p129
      %p131 = scmp.ne.s32.totalorder %s117, %s118
      %p132 = scmp.eq.s32.totalorder %s18, 1
      %p133 = por %p131, %p132
      %p135 = scmp.ne.s32.totalorder %s118, %s134
      %p136 = scmp.eq.s32.totalorder %s18, 0
      %p137 = por %p135, %p136
      %p138 = scmp.le.s32.totalorder 1, %s12
      %p139 = scmp.lt.s32.totalorder %s12, 3
      %p140 = pnand %p138, %p139
      %p141 = pneg %p140
      // Predicated region
      $region9: #{_strided_conv.1} parent=5 // pred_check
        _
      $region10: #{_strided_conv.1} parent=5 // pred_check_branch
        %143 = sbr.rel (%p140) target = $region12
      $region11: #{_strided_conv.1} parent=5 // pred_region
        %s144 = ssub.s32 %s12, 1
        // Predicated region
        $region13: #{_strided_conv.1} parent=11 // pred_check
          %p145 = pneg %p76
        $region14: #{_strided_conv.1} parent=11 // pred_check_branch
          %147 = sbr.rel (%p145) target = $region16
        $region15: #{_strided_conv.1} parent=11 // pred_region
          %p148 = scmp.lt.s32.totalorder %s22, 0
          %s149 = scalar_select %p148, %s22, 0
          %s150 = smul.addr %s149, 4
          %s151 = scalar_lea.vmem %s1, %s150
        $region16: #{_strided_conv.1} parent=11 // pred_fallthru
          _
        // Predicated region
        $region17: #{_strided_conv.1} parent=11 // pred_check
          %p152 = pneg %p102
        $region18: #{_strided_conv.1} parent=11 // pred_check_branch
          %154 = sbr.rel (%p152) target = $region20
        $region19: #{_strided_conv.1} parent=11 // pred_region
          %p155 = scmp.lt.s32.totalorder %s22, 0
          %s156 = scalar_select %p155, %s22, 0
          %s157 = scalar_lea.vmem %s2, %s156
        $region20: #{_strided_conv.1} parent=11 // pred_fallthru
          _
      $region12: #{_strided_conv.1} parent=5 // pred_fallthru
        _
      %p158 = scmp.lt.s32.totalorder %s12, 2
      // Predicated region
      $region21: #{_strided_conv.1} parent=5 // pred_check
        %p159 = pneg %p158
      $region22: #{_strided_conv.1} parent=5 // pred_check_branch
        %161 = sbr.rel (%p159) target = $region24
      $region23: #{_strided_conv.1} parent=5 // pred_region
        // Predicated region
        $region25: #{_strided_conv.1} parent=23 // pred_check
          %p162 = pneg %p44
        $region26: #{_strided_conv.1} parent=23 // pred_check_branch
          %164 = sbr.rel (%p162) target = $region28
        $region27: #{_strided_conv.1} parent=23 // pred_region
          %s165 = smul.u32 32, %s19
          %p166 = scmp.lt.s32.totalorder %s165, 63
          %s167 = scalar_select %p166, %s165, 63
          %s168 = smul.addr %s167, 2
          %s169 = smul.addr %s168, 4
          %s170 = scalar_lea.vmem %s0, %s169
          %s171 = smul.u32 32, %s19
        $region28: #{_strided_conv.1} parent=23 // pred_fallthru
          _
      $region24: #{_strided_conv.1} parent=5 // pred_fallthru
        _
      %p172 = scmp.le.s32.totalorder 1, %s12
      %p173 = scmp.lt.s32.totalorder %s12, 3
      %p174 = pnand %p172, %p173
      %p175 = pneg %p174
      // Predicated region
      $region29: #{_strided_conv.1} parent=5 // pred_check
        _
      $region30: #{_strided_conv.1} parent=5 // pred_check_branch
        %177 = sbr.rel (%p174) target = $region32
      $region31: #{_strided_conv.1} parent=5 // pred_region
        %s178 = ssub.s32 %s12, 1
        %s179 = smul.u32 32, %s21
        %p180 = scmp.lt.s32.totalorder %s179, 63
        %s181 = scalar_select %p180, %s179, 63
        %s182 = smul.addr %s181, 2
        %s183 = smul.addr %s182, 4
        %s184 = scalar_lea.vmem %s0, %s183
        %p185 = pneg %p50
        %p186 = pneg %p47
        %p187 = scmp.lt.s32.totalorder %s22, 0
        %s188 = scalar_select %p187, %s22, 0
        %s189 = smul.addr %s188, 4
        %s190 = scalar_lea.vmem %s1, %s189
        %p191 = pneg %p76
        %p192 = pneg %p73
        %p193 = scmp.lt.s32.totalorder %s22, 0
        %s194 = scalar_select %p193, %s22, 0
        %s195 = scalar_lea.vmem %s2, %s194
        %p196 = pneg %p102
        %p197 = pneg %p99
        %p198 = pneg %p130
        %p199 = pneg %p127
        %s200 = sand.u32 %s117, 1
        %s201 = scalar_lea.sflag [#allocation3], %s200
        %s202 = sand.u32 %s117, 1
        %s203 = smul.addr %s202, 128
        %s204 = scalar_lea.vmem [#allocation2], %s203
        %s205 = smul.u32 32, %s21
        %p206 = scmp.lt.s32.totalorder %s205, 63
        %s207 = scalar_select %p206, %s205, 63
        %s208 = smul.addr %s207, 2
        %s209 = smul.addr %s208, 4
        %s210 = scalar_lea.vmem %s0, %s209
        %s211 = smul.u32 32, %s21
        %p212 = scmp.lt.s32.totalorder %s22, 0
        %s213 = scalar_select %p212, %s22, 0
        %s214 = smul.addr %s213, 4
        %s215 = scalar_lea.vmem %s1, %s214
        %p216 = scmp.lt.s32.totalorder %s22, 0
        %s217 = scalar_select %p216, %s22, 0
        %s218 = scalar_lea.vmem %s2, %s217
        %s219 = smul.u32 32, %s21
        %v221 = vld [vmem:[%s210] sm:$0xff]
        %v222 = vld [vmem:[%s210 + $0x8] sm:$0xff]
        %v223 = vld [vmem:[%s210 + $0x10] sm:$0xff]
        %v224 = vld [vmem:[%s210 + $0x18] sm:$0xff]
        %v225 = vld [vmem:[%s210 + $0x20] sm:$0xff]
        %v226 = vld [vmem:[%s210 + $0x28] sm:$0xff]
        %v227 = vld [vmem:[%s210 + $0x30] sm:$0xff]
        %v228 = vld [vmem:[%s210 + $0x38] sm:$0xff]
        %v229 = vld [vmem:[%s210 + $0x40] sm:$0xff]
        %v230 = vld [vmem:[%s210 + $0x48] sm:$0xff]
        %v231 = vld [vmem:[%s210 + $0x50] sm:$0xff]
        %v232 = vld [vmem:[%s210 + $0x58] sm:$0xff]
        %v233 = vld [vmem:[%s210 + $0x60] sm:$0xff]
        %v234 = vld [vmem:[%s210 + $0x68] sm:$0xff]
        %v235 = vld [vmem:[%s210 + $0x70] sm:$0xff]
        %v236 = vld [vmem:[%s210 + $0x78] sm:$0xff]
        %v237 = vld [vmem:[%s210 + $0x80] sm:$0xff]
        %v238 = vld [vmem:[%s210 + $0x88] sm:$0xff]
        %v239 = vld [vmem:[%s210 + $0x90] sm:$0xff]
        %v240 = vld [vmem:[%s210 + $0x98] sm:$0xff]
        %v241 = vld [vmem:[%s210 + $0xa0] sm:$0xff]
        %v242 = vld [vmem:[%s210 + $0xa8] sm:$0xff]
        %v243 = vld [vmem:[%s210 + $0xb0] sm:$0xff]
        %v244 = vld [vmem:[%s210 + $0xb8] sm:$0xff]
        %v245 = vld [vmem:[%s210 + $0xc0] sm:$0xff]
        %v246 = vld [vmem:[%s210 + $0xc8] sm:$0xff]
        %v247 = vld [vmem:[%s210 + $0xd0] sm:$0xff]
        %v248 = vld [vmem:[%s210 + $0xd8] sm:$0xff]
        %v249 = vld [vmem:[%s210 + $0xe0] sm:$0xff]
        %v250 = vld [vmem:[%s210 + $0xe8] sm:$0xff]
        %v251 = vld [vmem:[%s210 + $0xf0] sm:$0xff]
        %v252 = vld [vmem:[%s210 + $0xf8] sm:$0xff]
        %v253 = vld [vmem:[%s215] sm:$0xf]
        %v254 = vld [vmem:[%s215 + $0x4] sm:$0xf]
        %v255 = vld [vmem:[%s215 + $0x8] sm:$0xf]
        %v256 = vld [vmem:[%s215 + $0xc] sm:$0xf]
        %v257 = vld [vmem:[%s215 + $0x10] sm:$0xf]
        %v258 = vld [vmem:[%s215 + $0x14] sm:$0xf]
        %v259 = vld [vmem:[%s215 + $0x18] sm:$0xf]
        %v260 = vld [vmem:[%s215 + $0x1c] sm:$0xf]
        %v261 = vld [vmem:[%s215 + $0x20] sm:$0xf]
        %v262 = vld [vmem:[%s215 + $0x24] sm:$0xf]
        %v263 = vld [vmem:[%s215 + $0x28] sm:$0xf]
        %v264 = vld [vmem:[%s215 + $0x2c] sm:$0xf]
        %v265 = vld [vmem:[%s215 + $0x30] sm:$0xf]
        %v266 = vld [vmem:[%s215 + $0x34] sm:$0xf]
        %v267 = vld [vmem:[%s215 + $0x38] sm:$0xf]
        %v268 = vld [vmem:[%s215 + $0x3c] sm:$0xf]
        %v269 = vld [vmem:[%s215 + $0x40] sm:$0xf]
        %v270 = vld [vmem:[%s215 + $0x44] sm:$0xf]
        %v271 = vld [vmem:[%s215 + $0x48] sm:$0x3]
        %v272 = vld [vmem:[%s218] sm:$0x1]
        %v274 = vperm.slane %v272, 0
        %v308 = vunpack.c.l.b16 %v221
        %v309 = vunpack.c.h.b16 %v221
        %v310 = vunpack.c.l.b16 %v222
        %v311 = vunpack.c.h.b16 %v222
        %v312 = vunpack.c.l.b16 %v223
        %v313 = vunpack.c.h.b16 %v223
        %v314 = vunpack.c.l.b16 %v224
        %v315 = vunpack.c.h.b16 %v224
        %v316 = vunpack.c.l.b16 %v225
        %v317 = vunpack.c.h.b16 %v225
        %v318 = vunpack.c.l.b16 %v226
        %v319 = vunpack.c.h.b16 %v226
        %v320 = vunpack.c.l.b16 %v227
        %v321 = vunpack.c.h.b16 %v227
        %v322 = vunpack.c.l.b16 %v228
        %v323 = vunpack.c.h.b16 %v228
        %v324 = vunpack.c.l.b16 %v229
        %v325 = vunpack.c.h.b16 %v229
        %v326 = vunpack.c.l.b16 %v230
        %v327 = vunpack.c.h.b16 %v230
        %v328 = vunpack.c.l.b16 %v231
        %v329 = vunpack.c.h.b16 %v231
        %v330 = vunpack.c.l.b16 %v232
        %v331 = vunpack.c.h.b16 %v232
        %v332 = vunpack.c.l.b16 %v233
        %v333 = vunpack.c.h.b16 %v233
        %v334 = vunpack.c.l.b16 %v234
        %v335 = vunpack.c.h.b16 %v234
        %v336 = vunpack.c.l.b16 %v235
        %v337 = vunpack.c.h.b16 %v235
        %v338 = vunpack.c.l.b16 %v236
        %v339 = vunpack.c.h.b16 %v236
        %v340 = vunpack.c.l.b16 %v237
        %v341 = vunpack.c.h.b16 %v237
        %v342 = vunpack.c.l.b16 %v238
        %v343 = vunpack.c.h.b16 %v238
        %v344 = vunpack.c.l.b16 %v239
        %v345 = vunpack.c.h.b16 %v239
        %v346 = vunpack.c.l.b16 %v240
        %v347 = vunpack.c.h.b16 %v240
        %v348 = vunpack.c.l.b16 %v241
        %v349 = vunpack.c.h.b16 %v241
        %v350 = vunpack.c.l.b16 %v242
        %v351 = vunpack.c.h.b16 %v242
        %v352 = vunpack.c.l.b16 %v243
        %v353 = vunpack.c.h.b16 %v243
        %v354 = vunpack.c.l.b16 %v244
        %v355 = vunpack.c.h.b16 %v244
        %v356 = vunpack.c.l.b16 %v245
        %v357 = vunpack.c.h.b16 %v245
        %v358 = vunpack.c.l.b16 %v246
        %v359 = vunpack.c.h.b16 %v246
        %v360 = vunpack.c.l.b16 %v247
        %v361 = vunpack.c.h.b16 %v247
        %v362 = vunpack.c.l.b16 %v248
        %v363 = vunpack.c.h.b16 %v248
        %v364 = vunpack.c.l.b16 %v249
        %v365 = vunpack.c.h.b16 %v249
        %v366 = vunpack.c.l.b16 %v250
        %v367 = vunpack.c.h.b16 %v250
        %v368 = vunpack.c.l.b16 %v251
        %v369 = vunpack.c.h.b16 %v251
        %v370 = vunpack.c.l.b16 %v252
        %v371 = vunpack.c.h.b16 %v252
        %v372 = vpack.c.b16 %v310, %v308
        %v373 = vpack.c.b16 %v311, %v309
        %v374 = vpack.c.b16 %v314, %v312
        %v375 = vpack.c.b16 %v315, %v313
        %v376 = vpack.c.b16 %v318, %v316
        %v377 = vpack.c.b16 %v319, %v317
        %v378 = vpack.c.b16 %v322, %v320
        %v379 = vpack.c.b16 %v323, %v321
        %v380 = vpack.c.b16 %v326, %v324
        %v381 = vpack.c.b16 %v327, %v325
        %v382 = vpack.c.b16 %v330, %v328
        %v383 = vpack.c.b16 %v331, %v329
        %v384 = vpack.c.b16 %v334, %v332
        %v385 = vpack.c.b16 %v335, %v333
        %v386 = vpack.c.b16 %v338, %v336
        %v387 = vpack.c.b16 %v339, %v337
        %v388 = vpack.c.b16 %v342, %v340
        %v389 = vpack.c.b16 %v343, %v341
        %v390 = vpack.c.b16 %v346, %v344
        %v391 = vpack.c.b16 %v347, %v345
        %v392 = vpack.c.b16 %v350, %v348
        %v393 = vpack.c.b16 %v351, %v349
        %v394 = vpack.c.b16 %v354, %v352
        %v395 = vpack.c.b16 %v355, %v353
        %v396 = vpack.c.b16 %v358, %v356
        %v397 = vpack.c.b16 %v359, %v357
        %v398 = vpack.c.b16 %v362, %v360
        %v399 = vpack.c.b16 %v363, %v361
        %v400 = vpack.c.b16 %v366, %v364
        %v401 = vpack.c.b16 %v367, %v365
        %v402 = vpack.c.b16 %v370, %v368
        %v403 = vpack.c.b16 %v371, %v369
        %v439 = vunpack.c.l.b16 %v253
        %v440 = vunpack.c.l.b16 %v254
        %v441 = vunpack.c.l.b16 %v255
        %v442 = vunpack.c.l.b16 %v256
        %v443 = vunpack.c.l.b16 %v257
        %v444 = vunpack.c.l.b16 %v258
        %v445 = vunpack.c.l.b16 %v259
        %v446 = vunpack.c.l.b16 %v260
        %v447 = vunpack.c.l.b16 %v261
        %v448 = vunpack.c.l.b16 %v262
        %v449 = vunpack.c.l.b16 %v263
        %v450 = vunpack.c.l.b16 %v264
        %v451 = vunpack.c.l.b16 %v265
        %v452 = vunpack.c.l.b16 %v266
        %v453 = vunpack.c.l.b16 %v267
        %v454 = vunpack.c.l.b16 %v268
        %v455 = vunpack.c.l.b16 %v269
        %v456 = vunpack.c.l.b16 %v270
        %v457 = vunpack.c.l.b16 %v271
        %v458 = vpack.c.b16 %v440, %v439
        %v459 = vpack.c.b16 %v442, %v441
        %v460 = vpack.c.b16 %v444, %v443
        %v461 = vpack.c.b16 %v446, %v445
        %v462 = vpack.c.b16 %v448, %v447
        %v463 = vpack.c.b16 %v450, %v449
        %v464 = vpack.c.b16 %v452, %v451
        %v465 = vpack.c.b16 %v454, %v453
        %v466 = vpack.c.b16 %v456, %v455
        %v467 = vpack.c.b16 %v457, %v457
        %vm477 = vcmask 154624
        %v479 = vsel %vm477, %v373, 0
        %v482 = vsel %vm477, %v375, 0
        %v485 = vsel %vm477, %v377, 0
        %v488 = vsel %vm477, %v379, 0
        %v491 = vsel %vm477, %v381, 0
        %v494 = vsel %vm477, %v383, 0
        %v497 = vsel %vm477, %v385, 0
        %v500 = vsel %vm477, %v387, 0
        %v503 = vsel %vm477, %v389, 0
        %v506 = vsel %vm477, %v391, 0
        %v509 = vsel %vm477, %v393, 0
        %v512 = vsel %vm477, %v395, 0
        %v515 = vsel %vm477, %v397, 0
        %v518 = vsel %vm477, %v399, 0
        %v521 = vsel %vm477, %v401, 0
        %v524 = vsel %vm477, %v403, 0
        %vm526 = vcmask 1040384
        %vm527 = vcmask 1041408
        %v528 = vsel %vm526, 4294967295, 65535
        %v529 = vsel %vm527, %v528, 0
        %v531 = vand.u32 %v467, %v529
        %533 = vmatpush.bf16.msra.mxu0 %v465
        %534 = vmatpush.bf16.msra.mxu0 %v464
        %535 = vmatpush.bf16.msra.mxu0 %v463
        %536 = vmatpush.bf16.msra.mxu0 %v462
        %537 = vmatpush.bf16.msra.mxu0 %v461
        %538 = vmatpush.bf16.msra.mxu0 %v460
        %539 = vmatpush.bf16.msra.mxu0 %v459
        %540 = vmatpush.bf16.msra.mxu0 %v458
        %541 = vmatmul.bf16.gmra.mxu0 %v372
        %v542 = vpop.f32.mrf.mxu0
        %v543 = vadd.f32 %v274, %v542
        %v544 = vpop.f32.mrf.mxu0
        %v545 = vadd.f32 %v274, %v544
        %546 = vmatmul.bf16.gmra.mxu0 %v374
        %v547 = vpop.f32.mrf.mxu0
        %v548 = vadd.f32 %v274, %v547
        %v549 = vpop.f32.mrf.mxu0
        %v550 = vadd.f32 %v274, %v549
        %551 = vmatmul.bf16.gmra.mxu0 %v376
        %v552 = vpop.f32.mrf.mxu0
        %v553 = vadd.f32 %v274, %v552
        %v554 = vpop.f32.mrf.mxu0
        %v555 = vadd.f32 %v274, %v554
        %556 = vmatmul.bf16.gmra.mxu0 %v378
        %v557 = vpop.f32.mrf.mxu0
        %v558 = vadd.f32 %v274, %v557
        %v559 = vpop.f32.mrf.mxu0
        %v560 = vadd.f32 %v274, %v559
        %561 = vmatmul.bf16.gmra.mxu0 %v380
        %v562 = vpop.f32.mrf.mxu0
        %v563 = vadd.f32 %v274, %v562
        %v564 = vpop.f32.mrf.mxu0
        %v565 = vadd.f32 %v274, %v564
        %566 = vmatmul.bf16.gmra.mxu0 %v382
        %v567 = vpop.f32.mrf.mxu0
        %v568 = vadd.f32 %v274, %v567
        %v569 = vpop.f32.mrf.mxu0
        %v570 = vadd.f32 %v274, %v569
        %571 = vmatmul.bf16.gmra.mxu0 %v384
        %v572 = vpop.f32.mrf.mxu0
        %v573 = vadd.f32 %v274, %v572
        %v574 = vpop.f32.mrf.mxu0
        %v575 = vadd.f32 %v274, %v574
        %576 = vmatmul.bf16.gmra.mxu0 %v386
        %v577 = vpop.f32.mrf.mxu0
        %v578 = vadd.f32 %v274, %v577
        %v579 = vpop.f32.mrf.mxu0
        %v580 = vadd.f32 %v274, %v579
        %581 = vmatmul.bf16.gmra.mxu0 %v388
        %v582 = vpop.f32.mrf.mxu0
        %v583 = vadd.f32 %v274, %v582
        %v584 = vpop.f32.mrf.mxu0
        %v585 = vadd.f32 %v274, %v584
        %586 = vmatmul.bf16.gmra.mxu0 %v390
        %v587 = vpop.f32.mrf.mxu0
        %v588 = vadd.f32 %v274, %v587
        %v589 = vpop.f32.mrf.mxu0
        %v590 = vadd.f32 %v274, %v589
        %591 = vmatmul.bf16.gmra.mxu0 %v392
        %v592 = vpop.f32.mrf.mxu0
        %v593 = vadd.f32 %v274, %v592
        %v594 = vpop.f32.mrf.mxu0
        %v595 = vadd.f32 %v274, %v594
        %596 = vmatmul.bf16.gmra.mxu0 %v394
        %v597 = vpop.f32.mrf.mxu0
        %v598 = vadd.f32 %v274, %v597
        %v599 = vpop.f32.mrf.mxu0
        %v600 = vadd.f32 %v274, %v599
        %601 = vmatmul.bf16.gmra.mxu0 %v396
        %v602 = vpop.f32.mrf.mxu0
        %v603 = vadd.f32 %v274, %v602
        %v604 = vpop.f32.mrf.mxu0
        %v605 = vadd.f32 %v274, %v604
        %606 = vmatmul.bf16.gmra.mxu0 %v398
        %v607 = vpop.f32.mrf.mxu0
        %v608 = vadd.f32 %v274, %v607
        %v609 = vpop.f32.mrf.mxu0
        %v610 = vadd.f32 %v274, %v609
        %611 = vmatmul.bf16.gmra.mxu0 %v400
        %v612 = vpop.f32.mrf.mxu0
        %v613 = vadd.f32 %v274, %v612
        %v614 = vpop.f32.mrf.mxu0
        %v615 = vadd.f32 %v274, %v614
        %616 = vmatmul.bf16.gmra.mxu0 %v402
        %v617 = vpop.f32.mrf.mxu0
        %v618 = vadd.f32 %v274, %v617
        %v619 = vpop.f32.mrf.mxu0
        %v620 = vadd.f32 %v274, %v619
        %621 = vdwg.mxu0
        %622 = vmatpush.bf16.msra.mxu0 0
        %623 = vmatpush.bf16.msra.mxu0 0
        %624 = vmatpush.bf16.msra.mxu0 0
        %625 = vmatpush.bf16.msra.mxu0 0
        %626 = vmatpush.bf16.msra.mxu0 0
        %627 = vmatpush.bf16.msra.mxu0 0
        %628 = vmatpush.bf16.msra.mxu0 %v531
        %629 = vmatpush.bf16.msra.mxu0 %v466
        %630 = vmatmul.bf16.gmra.mxu0 %v479
        %v631 = vpop.f32.mrf.mxu0
        %v632 = vadd.f32 %v543, %v631
        %v633 = vpop.f32.mrf.mxu0
        %v634 = vadd.f32 %v545, %v633
        %635 = vmatmul.bf16.gmra.mxu0 %v482
        %v636 = vpop.f32.mrf.mxu0
        %v637 = vadd.f32 %v548, %v636
        %v638 = vpop.f32.mrf.mxu0
        %v639 = vadd.f32 %v550, %v638
        %640 = vmatmul.bf16.gmra.mxu0 %v485
        %v641 = vpop.f32.mrf.mxu0
        %v642 = vadd.f32 %v553, %v641
        %v643 = vpop.f32.mrf.mxu0
        %v644 = vadd.f32 %v555, %v643
        %645 = vmatmul.bf16.gmra.mxu0 %v488
        %v646 = vpop.f32.mrf.mxu0
        %v647 = vadd.f32 %v558, %v646
        %v648 = vpop.f32.mrf.mxu0
        %v649 = vadd.f32 %v560, %v648
        %650 = vmatmul.bf16.gmra.mxu0 %v491
        %v651 = vpop.f32.mrf.mxu0
        %v652 = vadd.f32 %v563, %v651
        %v653 = vpop.f32.mrf.mxu0
        %v654 = vadd.f32 %v565, %v653
        %655 = vmatmul.bf16.gmra.mxu0 %v494
        %v656 = vpop.f32.mrf.mxu0
        %v657 = vadd.f32 %v568, %v656
        %v658 = vpop.f32.mrf.mxu0
        %v659 = vadd.f32 %v570, %v658
        %660 = vmatmul.bf16.gmra.mxu0 %v497
        %v661 = vpop.f32.mrf.mxu0
        %v662 = vadd.f32 %v573, %v661
        %v663 = vpop.f32.mrf.mxu0
        %v664 = vadd.f32 %v575, %v663
        %665 = vmatmul.bf16.gmra.mxu0 %v500
        %v666 = vpop.f32.mrf.mxu0
        %v667 = vadd.f32 %v578, %v666
        %v668 = vpop.f32.mrf.mxu0
        %v669 = vadd.f32 %v580, %v668
        %670 = vmatmul.bf16.gmra.mxu0 %v503
        %v671 = vpop.f32.mrf.mxu0
        %v672 = vadd.f32 %v583, %v671
        %v673 = vpop.f32.mrf.mxu0
        %v674 = vadd.f32 %v585, %v673
        %675 = vmatmul.bf16.gmra.mxu0 %v506
        %v676 = vpop.f32.mrf.mxu0
        %v677 = vadd.f32 %v588, %v676
        %v678 = vpop.f32.mrf.mxu0
        %v679 = vadd.f32 %v590, %v678
        %680 = vmatmul.bf16.gmra.mxu0 %v509
        %v681 = vpop.f32.mrf.mxu0
        %v682 = vadd.f32 %v593, %v681
        %v683 = vpop.f32.mrf.mxu0
        %v684 = vadd.f32 %v595, %v683
        %685 = vmatmul.bf16.gmra.mxu0 %v512
        %v686 = vpop.f32.mrf.mxu0
        %v687 = vadd.f32 %v598, %v686
        %v688 = vpop.f32.mrf.mxu0
        %v689 = vadd.f32 %v600, %v688
        %690 = vmatmul.bf16.gmra.mxu0 %v515
        %v691 = vpop.f32.mrf.mxu0
        %v692 = vadd.f32 %v603, %v691
        %v693 = vpop.f32.mrf.mxu0
        %v694 = vadd.f32 %v605, %v693
        %695 = vmatmul.bf16.gmra.mxu0 %v518
        %v696 = vpop.f32.mrf.mxu0
        %v697 = vadd.f32 %v608, %v696
        %v698 = vpop.f32.mrf.mxu0
        %v699 = vadd.f32 %v610, %v698
        %700 = vmatmul.bf16.gmra.mxu0 %v521
        %v701 = vpop.f32.mrf.mxu0
        %v702 = vadd.f32 %v613, %v701
        %v703 = vpop.f32.mrf.mxu0
        %v704 = vadd.f32 %v615, %v703
        %705 = vmatmul.bf16.gmra.mxu0 %v524
        %v706 = vpop.f32.mrf.mxu0
        %v707 = vadd.f32 %v618, %v706
        %v708 = vpop.f32.mrf.mxu0
        %v709 = vadd.f32 %v620, %v708
        %710 = vdwg.mxu0
        %v711 = vpack.c.bf16 %v632, %v632
        %v712 = vpack.c.bf16 %v634, %v634
        %v713 = vpack.c.bf16 %v637, %v637
        %v714 = vpack.c.bf16 %v639, %v639
        %v715 = vpack.c.bf16 %v642, %v642
        %v716 = vpack.c.bf16 %v644, %v644
        %v717 = vpack.c.bf16 %v647, %v647
        %v718 = vpack.c.bf16 %v649, %v649
        %v719 = vpack.c.bf16 %v652, %v652
        %v720 = vpack.c.bf16 %v654, %v654
        %v721 = vpack.c.bf16 %v657, %v657
        %v722 = vpack.c.bf16 %v659, %v659
        %v723 = vpack.c.bf16 %v662, %v662
        %v724 = vpack.c.bf16 %v664, %v664
        %v725 = vpack.c.bf16 %v667, %v667
        %v726 = vpack.c.bf16 %v669, %v669
        %v727 = vpack.c.bf16 %v672, %v672
        %v728 = vpack.c.bf16 %v674, %v674
        %v729 = vpack.c.bf16 %v677, %v677
        %v730 = vpack.c.bf16 %v679, %v679
        %v731 = vpack.c.bf16 %v682, %v682
        %v732 = vpack.c.bf16 %v684, %v684
        %v733 = vpack.c.bf16 %v687, %v687
        %v734 = vpack.c.bf16 %v689, %v689
        %v735 = vpack.c.bf16 %v692, %v692
        %v736 = vpack.c.bf16 %v694, %v694
        %v737 = vpack.c.bf16 %v697, %v697
        %v738 = vpack.c.bf16 %v699, %v699
        %v739 = vpack.c.bf16 %v702, %v702
        %v740 = vpack.c.bf16 %v704, %v704
        %v741 = vpack.c.bf16 %v707, %v707
        %v742 = vpack.c.bf16 %v709, %v709
        %vm743 = vcmask 519168
        %744 = vst.msk [vmem:[%s204] sm:$0xf] %vm743, %v711
        %745 = vst.msk [vmem:[%s204 + $0x4] sm:$0xf] %vm743, %v712
        %746 = vst.msk [vmem:[%s204 + $0x8] sm:$0xf] %vm743, %v713
        %747 = vst.msk [vmem:[%s204 + $0xc] sm:$0xf] %vm743, %v714
        %748 = vst.msk [vmem:[%s204 + $0x10] sm:$0xf] %vm743, %v715
        %749 = vst.msk [vmem:[%s204 + $0x14] sm:$0xf] %vm743, %v716
        %750 = vst.msk [vmem:[%s204 + $0x18] sm:$0xf] %vm743, %v717
        %751 = vst.msk [vmem:[%s204 + $0x1c] sm:$0xf] %vm743, %v718
        %752 = vst.msk [vmem:[%s204 + $0x20] sm:$0xf] %vm743, %v719
        %753 = vst.msk [vmem:[%s204 + $0x24] sm:$0xf] %vm743, %v720
        %754 = vst.msk [vmem:[%s204 + $0x28] sm:$0xf] %vm743, %v721
        %755 = vst.msk [vmem:[%s204 + $0x2c] sm:$0xf] %vm743, %v722
        %756 = vst.msk [vmem:[%s204 + $0x30] sm:$0xf] %vm743, %v723
        %757 = vst.msk [vmem:[%s204 + $0x34] sm:$0xf] %vm743, %v724
        %758 = vst.msk [vmem:[%s204 + $0x38] sm:$0xf] %vm743, %v725
        %759 = vst.msk [vmem:[%s204 + $0x3c] sm:$0xf] %vm743, %v726
        %760 = vst.msk [vmem:[%s204 + $0x40] sm:$0xf] %vm743, %v727
        %761 = vst.msk [vmem:[%s204 + $0x44] sm:$0xf] %vm743, %v728
        %762 = vst.msk [vmem:[%s204 + $0x48] sm:$0xf] %vm743, %v729
        %763 = vst.msk [vmem:[%s204 + $0x4c] sm:$0xf] %vm743, %v730
        %764 = vst.msk [vmem:[%s204 + $0x50] sm:$0xf] %vm743, %v731
        %765 = vst.msk [vmem:[%s204 + $0x54] sm:$0xf] %vm743, %v732
        %766 = vst.msk [vmem:[%s204 + $0x58] sm:$0xf] %vm743, %v733
        %767 = vst.msk [vmem:[%s204 + $0x5c] sm:$0xf] %vm743, %v734
        %768 = vst.msk [vmem:[%s204 + $0x60] sm:$0xf] %vm743, %v735
        %769 = vst.msk [vmem:[%s204 + $0x64] sm:$0xf] %vm743, %v736
        %770 = vst.msk [vmem:[%s204 + $0x68] sm:$0xf] %vm743, %v737
        %771 = vst.msk [vmem:[%s204 + $0x6c] sm:$0xf] %vm743, %v738
        %772 = vst.msk [vmem:[%s204 + $0x70] sm:$0xf] %vm743, %v739
        %773 = vst.msk [vmem:[%s204 + $0x74] sm:$0xf] %vm743, %v740
        %774 = vst.msk [vmem:[%s204 + $0x78] sm:$0xf] %vm743, %v741
        %775 = vst.msk [vmem:[%s204 + $0x7c] sm:$0xf] %vm743, %v742
        %s776 = sand.u32 %s117, 1
        %s777 = scalar_lea.sflag [#allocation3], %s776
        %s778 = sand.u32 %s117, 1
        %s779 = smul.addr %s778, 128
        %s780 = scalar_lea.vmem [#allocation2], %s779
        // Predicated region
        $region33: #{_strided_conv.1} parent=31 // pred_check
          %p781 = pneg %p127
        $region34: #{_strided_conv.1} parent=31 // pred_check_branch
          %783 = sbr.rel (%p781) target = $region36
        $region35: #{_strided_conv.1} parent=31 // pred_region
          %s784 = smul.u32 32, %s21
          %786 = vsyncadd %s777, 0
          %s787 = sadd.s32 %s22, %s784
          %s788 = smul.addr %s787, 4
          %s789 = scalar_lea.hbm %s3, %s788
          %s790 = sshll.u32 %s780, 4
          %s791 = int_to_ptr.vmem [resolvable:$true] %s790
          %s792 = sshll.u32 %s789, 4
          %s793 = int_to_ptr.hbm [resolvable:$true] %s792
          %798 = dma.vmem_to_hbm [thread:$0]  %s791, 2048, %s793, %s777, 64, 64, 4
        $region36: #{_strided_conv.1} parent=31 // pred_fallthru
          _
      $region32: #{_strided_conv.1} parent=5 // pred_fallthru
        _
      %p799 = scmp.le.s32.totalorder 2, %s12
      // Predicated region
      $region37: #{_strided_conv.1} parent=5 // pred_check
        %p800 = pneg %p799
      $region38: #{_strided_conv.1} parent=5 // pred_check_branch
        %802 = sbr.rel (%p800) target = $region40
      $region39: #{_strided_conv.1} parent=5 // pred_region
        %s803 = ssub.s32 %s12, 2
        // Predicated region
        $region41: #{_strided_conv.1} parent=39 // pred_check
          %p804 = pneg %p133
        $region42: #{_strided_conv.1} parent=39 // pred_check_branch
          %806 = sbr.rel (%p804) target = $region44
        $region43: #{_strided_conv.1} parent=39 // pred_region
          %s807 = sand.u32 %s118, 1
          %s808 = scalar_lea.sflag [#allocation3], %s807
          %s809 = sand.u32 %s118, 1
          %s810 = smul.addr %s809, 128
          %s811 = scalar_lea.vmem [#allocation2], %s810
          %813 = dma.done %s808, 2048
        $region44: #{_strided_conv.1} parent=39 // pred_fallthru
          _
      $region40: #{_strided_conv.1} parent=5 // pred_fallthru
        _
    $region6: #{_strided_conv.1} parent=1 // loop_footer
      %s16 = sadd.s32 1, %s12
    $region7: #{_strided_conv.1} parent=1 // loop_footer_branch
      %11 = sbr.rel target = $region3
    $region8: #{_strided_conv.1} parent=1 // loop_exit
      _
    %814 = vsyncpa [#allocation3], 1
    %s815 = scalar_lea.sflag [#allocation3], 1
    %816 = vsyncpa %s815, 1

</llo_original>
